<compile_context>
chip_gen: v6e
topology: v6e:2x2x1
jax: 0.10.0
libtpu: 0.0.40
codegen_flags: <defaults>
</compile_context>

<pallas_src>
import jax
import jax.numpy as jnp
from jax.experimental import pallas as pl
from jax.experimental.pallas import tpu as pltpu

CLASS_NUM = 4           # Config.class_num (incl. background = class 0)
OVERLAP_THRESHOLD = 0.5
VARIANCES = (0.1, 0.2)  # standard SSD encode variances


# --------------------------------------------------------------------------
# Pallas kernel: per-box cross-entropy + masked smooth-L1 sum
#   loc_ref/tloc_ref : (Bt, 4, R, 128)
#   conf_ref         : (Bt, C, R, 128)
#   tconf_ref        : (Bt, R, 128) int32
#   ce_ref           : (Bt, R, 128) f32   (dense, unmasked stores)
#   locloss_ref      : (1, 1, 1)    f32   (per-grid-step partial)
# --------------------------------------------------------------------------
def _perbox_kernel(loc_ref, tloc_ref, conf_ref, tconf_ref, ce_ref, locloss_ref):
    tconf = tconf_ref[...]                               # (Bt, R, 128) int32
    pos = (tconf > 0).astype(jnp.float32)                # (Bt, R, 128)

    # ---- smooth-L1 localization loss summed over positive boxes ----
    loc = loc_ref[...].astype(jnp.float32)               # (Bt, 4, R, 128)
    tloc = tloc_ref[...].astype(jnp.float32)
    sl1_box = None
    for c in range(loc.shape[1]):                        # unrolled, C=4 slabs
        d = loc[:, c] - tloc[:, c]                       # (Bt, R, 128)
        ad = jnp.abs(d)
        t = jnp.where(ad < 1.0, 0.5 * d * d, ad - 0.5)
        sl1_box = t if sl1_box is None else sl1_box + t
    # single scalar reduce per grid step (not per prior-tile)
    locloss_ref[...] = jnp.zeros_like(locloss_ref) + jnp.sum(sl1_box * pos)

    # ---- per-box cross entropy: logsumexp(conf) - conf[target] ----
    conf = conf_ref[...].astype(jnp.float32)             # (Bt, C, R, 128)
    num_classes = conf.shape[1]
    m = conf[:, 0]
    for c in range(1, num_classes):                      # VPU elementwise max
        m = jnp.maximum(m, conf[:, c])
    s = jnp.zeros_like(m)
    g = jnp.zeros_like(m)
    for c in range(num_classes):                         # VPU/EUP elementwise
        cc = conf[:, c]
        s = s + jnp.exp(cc - m)
        g = g + jnp.where(tconf == c, cc, 0.0)
    ce_ref[...] = (jnp.log(s) + m) - g                   # dense (Bt,R,128) store


def perbox_losses(loc_t, tloc_t, conf_t, tconf):
    """loc_t/tloc_t: (B,4,P); conf_t: (B,C,P); tconf: (B,P) int32.

    Returns (per-box CE (B, P), total positive-box smooth-L1 sum)."""
    B, _, P = loc_t.shape
    C = conf_t.shape[1]

    # Pad the prior axis so it folds into (R, 128) tiles with R % 8 == 0.
    ppad = ((P + 1023) // 1024) * 1024
    R = ppad // 128
    pad = ppad - P
    if pad:
        pw3 = ((0, 0), (0, 0), (0, pad))
        loc_t = jnp.pad(loc_t, pw3)
        tloc_t = jnp.pad(tloc_t, pw3)
        conf_t = jnp.pad(conf_t, pw3)
        tconf = jnp.pad(tconf, ((0, 0), (0, pad)))  # padded boxes -> background

    loc_r = loc_t.reshape(B, 4, R, 128)
    tloc_r = tloc_t.reshape(B, 4, R, 128)
    conf_r = conf_t.reshape(B, C, R, 128)
    tconf_r = tconf.reshape(B, R, 128)

    # Fold several batch rows per grid step (amortize the ~600-cycle per-step
    # cost), keeping >= 2 grid entries when B >= 2 (v7x two-TensorCore
    # megacore) and the double-buffered block well inside scoped VMEM.
    in_itemsize = jnp.dtype(loc_r.dtype).itemsize
    conf_itemsize = jnp.dtype(conf_r.dtype).itemsize
    row_bytes = (R * 128) * (8 * in_itemsize + C * conf_itemsize + 4 + 4)
    bt = 1
    cap = max(1, min(8, B // 2)) if B >= 2 else 1
    for cand in range(1, cap + 1):
        if B % cand == 0 and 3 * cand * row_bytes <= (24 << 20):
            bt = cand
    nb = B // bt

    ce, locloss = pl.pallas_call(
        _perbox_kernel,
        out_shape=(
            jax.ShapeDtypeStruct((B, R, 128), jnp.float32),
            jax.ShapeDtypeStruct((nb, 1, 1), jnp.float32),
        ),
        grid_spec=pltpu.PrefetchScalarGridSpec(
            num_scalar_prefetch=0,
            grid=(nb,),
            in_specs=[
                pl.BlockSpec((bt, 4, R, 128), lambda g: (g, 0, 0, 0)),
                pl.BlockSpec((bt, 4, R, 128), lambda g: (g, 0, 0, 0)),
                pl.BlockSpec((bt, C, R, 128), lambda g: (g, 0, 0, 0)),
                pl.BlockSpec((bt, R, 128), lambda g: (g, 0, 0)),
            ],
            out_specs=[
                pl.BlockSpec((bt, R, 128), lambda g: (g, 0, 0)),
                pl.BlockSpec((1, 1, 1), lambda g: (g, 0, 0)),
            ],
        ),
        compiler_params=pltpu.CompilerParams(
            dimension_semantics=("parallel",)),
    )(loc_r, tloc_r, conf_r, tconf_r)

    ce = ce.reshape(B, ppad)[:, :P]          # drop prior-axis padding
    return ce, jnp.sum(locloss)              # sum per-block partials in JAX


# --------------------------------------------------------------------------
# Plain-JAX glue: prior <-> ground-truth matching (utils.match equivalent)
# --------------------------------------------------------------------------
def point_form(priors):
    return jnp.concatenate([priors[:, :2] - priors[:, 2:] / 2.0,
                            priors[:, :2] + priors[:, 2:] / 2.0], axis=1)


def jaccard(box_a, box_b):
    max_xy = jnp.minimum(box_a[:, None, 2:], box_b[None, :, 2:])
    min_xy = jnp.maximum(box_a[:, None, :2], box_b[None, :, :2])
    inter_wh = jnp.clip(max_xy - min_xy, 0.0)
    inter = inter_wh[..., 0] * inter_wh[..., 1]
    area_a = ((box_a[:, 2] - box_a[:, 0]) * (box_a[:, 3] - box_a[:, 1]))[:, None]
    area_b = ((box_b[:, 2] - box_b[:, 0]) * (box_b[:, 3] - box_b[:, 1]))[None, :]
    return inter / (area_a + area_b - inter)


def encode(matched, priors, variances):
    g_cxcy = (matched[:, :2] + matched[:, 2:]) / 2.0 - priors[:, :2]
    g_cxcy = g_cxcy / (variances[0] * priors[:, 2:])
    g_wh = (matched[:, 2:] - matched[:, :2]) / priors[:, 2:]
    g_wh = jnp.log(g_wh) / variances[1]
    return jnp.concatenate([g_cxcy, g_wh], axis=1)


def match(threshold, truths, priors, labels):
    overlaps = jaccard(truths, point_form(priors))      # (T, P)
    best_prior_idx = jnp.argmax(overlaps, axis=1)       # (T,)
    best_truth_overlap = jnp.max(overlaps, axis=0)      # (P,)
    best_truth_idx = jnp.argmax(overlaps, axis=0)       # (P,)
    best_truth_overlap = best_truth_overlap.at[best_prior_idx].set(2.0)
    best_truth_idx = best_truth_idx.at[best_prior_idx].set(
        jnp.arange(truths.shape[0]))
    matches = truths[best_truth_idx]                    # (P, 4)
    conf = labels[best_truth_idx].astype(jnp.int32) + 1
    conf = jnp.where(best_truth_overlap < threshold, 0, conf)
    loc = encode(matches, priors, VARIANCES)
    return loc, conf


def _batched_match(targets, priors):
    """Vmapped matching when all images have the same object count."""
    shapes = {tuple(t.shape) for t in targets}
    if len(shapes) == 1:
        tstack = jnp.stack(targets, axis=0)              # (B, T, 5)
        return jax.vmap(
            lambda tt: match(OVERLAP_THRESHOLD, tt[:, :-1], priors, tt[:, -1])
        )(tstack)
    # Ragged object counts: fall back to a per-image loop.
    tl, tc = [], []
    for t in targets:
        l, c = match(OVERLAP_THRESHOLD, t[:, :-1], priors, t[:, -1])
        tl.append(l)
        tc.append(c)
    return jnp.stack(tl, 0), jnp.stack(tc, 0)


# --------------------------------------------------------------------------
# LossFun.forward equivalent
# --------------------------------------------------------------------------
def loss_fun(prediction, targets, priors_boxes):
    loc_list, conf_list = prediction
    B = loc_list[0].shape[0]
    # Build the kernel's dense (B, C, P) layout directly while concatenating
    # the SSD head outputs (single layout pass; no separate slab transpose).
    loc_t = jnp.concatenate(
        [jnp.transpose(o.reshape(B, -1, 4), (0, 2, 1)) for o in loc_list],
        axis=2)                                                       # (B,4,P)
    conf_t = jnp.concatenate(
        [jnp.transpose(o.reshape(B, -1, CLASS_NUM), (0, 2, 1)) for o in conf_list],
        axis=2)                                                       # (B,C,P)
    priors = jnp.concatenate([o.reshape(-1, 4) for o in priors_boxes], axis=0)
    P = loc_t.shape[2]

    target_loc, target_conf = _batched_match(targets, priors)  # (B,P,4),(B,P)
    tloc_t = jnp.transpose(target_loc, (0, 2, 1))               # (B,4,P)
    # Clamp the gather index into [0, C-1] (matches torch.gather preconditions).
    tconf = jnp.clip(target_conf.astype(jnp.int32), 0, CLASS_NUM - 1)

    # Pallas hot path: per-box CE + masked smooth-L1 sum.
    ce, loss_loc_sum = perbox_losses(loc_t, tloc_t, conf_t, tconf)

    # Hard negative mining.
    # TODO(synk): per-row descending sort / rank has no clean Pallas TPU
    # equivalent; kept in XLA (single argsort + inverse-permutation scatter).
    pos = target_conf > 0
    loss_c_mine = jnp.where(pos, 0.0, ce)
    loss_idx = jnp.argsort(-loss_c_mine, axis=1)       # descending
    bidx = jnp.arange(B)[:, None]
    ranks = jnp.broadcast_to(
        jnp.arange(P, dtype=loss_idx.dtype)[None, :], (B, P))
    idx_rank = jnp.zeros_like(loss_idx).at[bidx, loss_idx].set(ranks)
    num_pos = jnp.sum(pos.astype(jnp.int32), axis=1, keepdims=True)
    num_neg = jnp.minimum(3 * num_pos, P - 1)
    neg = idx_rank < num_neg
    sel = jnp.logical_or(pos, neg)

    # Trivial masked reduce: let XLA fuse it (no Pallas launch needed).
    loss_conf_sum = jnp.sum(jnp.where(sel, ce, 0.0))

    # Guard against the zero-positive degenerate case (inf/NaN otherwise).
    N = jnp.maximum(jnp.sum(num_pos).astype(jnp.float32), 1.0)
    return loss_loc_sum / N, loss_conf_sum / N


# --------------------------------------------------------------------------
# Pure-JAX reference (for sanity checking the kernel path)
# --------------------------------------------------------------------------
def reference_loss(prediction, targets, priors_boxes):
    loc_list, conf_list = prediction
    B = loc_list[0].shape[0]
    loc_data = jnp.concatenate([o.reshape(B, -1, 4) for o in loc_list], axis=1)
    conf_data = jnp.concatenate(
        [o.reshape(B, -1, CLASS_NUM) for o in conf_list], axis=1)
    priors = jnp.concatenate([o.reshape(-1, 4) for o in priors_boxes], axis=0)
    P = loc_data.shape[1]
    tl, tc = [], []
    for b in range(B):
        l, c = match(OVERLAP_THRESHOLD, targets[b][:, :-1], priors,
                     targets[b][:, -1])
        tl.append(l)
        tc.append(c)
    target_loc = jnp.stack(tl, 0)
    target_conf = jnp.stack(tc, 0)
    pos = target_conf > 0
    d = loc_data - target_loc
    ad = jnp.abs(d)
    sl1 = jnp.where(ad < 1.0, 0.5 * d * d, ad - 0.5)
    loss_loc = jnp.sum(jnp.where(pos[..., None], sl1, 0.0))
    m = jnp.max(conf_data, axis=-1, keepdims=True)
    lse = jnp.log(jnp.sum(jnp.exp(conf_data - m), axis=-1, keepdims=True)) + m
    g = jnp.take_along_axis(conf_data, target_conf[..., None], axis=-1)
    ce = (lse - g)[..., 0]
    loss_c_mine = jnp.where(pos, 0.0, ce)
    loss_idx = jnp.argsort(-loss_c_mine, axis=1)
    idx_rank = jnp.argsort(loss_idx, axis=1)
    num_pos = jnp.sum(pos.astype(jnp.int32), axis=1, keepdims=True)
    num_neg = jnp.minimum(3 * num_pos, P - 1)
    neg = idx_rank < num_neg
    sel = jnp.logical_or(pos, neg)
    loss_conf = jnp.sum(jnp.where(sel, ce, 0.0))
    N = jnp.maximum(jnp.sum(num_pos).astype(jnp.float32), 1.0)
    return loss_loc / N, loss_conf / N


# --------------------------------------------------------------------------
if __name__ == "__main__":
    key = jax.random.PRNGKey(0)
    B = 2
    A = 4                       # anchors per feature-map cell
    fmaps = [(4, 4), (2, 2)]    # two SSD heads -> 4*4*4 + 2*2*4 = 80 priors

    loc_list, conf_list, prior_list = [], [], []
    k = key
    for (h, w) in fmaps:
        k, k1, k2 = jax.random.split(k, 3)
        loc_list.append(
            jax.random.normal(k1, (B, h, w, A * 4), jnp.float32) * 0.1)
        conf_list.append(
            jax.random.normal(k2, (B, h, w, A * CLASS_NUM), jnp.float32))
        cy = (jnp.arange(h, dtype=jnp.float32) + 0.5) / h
        cx = (jnp.arange(w, dtype=jnp.float32) + 0.5) / w
        cyg, cxg = jnp.meshgrid(cy, cx, indexing="ij")
        sizes = jnp.linspace(0.2, 0.5, A)
        pri = jnp.stack([
            jnp.broadcast_to(cxg[..., None], (h, w, A)),
            jnp.broadcast_to(cyg[..., None], (h, w, A)),
            jnp.broadcast_to(sizes, (h, w, A)),
            jnp.broadcast_to(sizes, (h, w, A)),
        ], axis=-1)
        prior_list.append(pri.reshape(-1, 4))

    # Ground-truth targets: per-image (num_objs, 5) = [xmin,ymin,xmax,ymax,label]
    targets = []
    num_objs = 3
    for b in range(B):
        k, k1, k2, k3 = jax.random.split(k, 4)
        centers = jax.random.uniform(k1, (num_objs, 2), minval=0.25, maxval=0.75)
        halfs = jax.random.uniform(k2, (num_objs, 2), minval=0.08, maxval=0.2)
        boxes = jnp.clip(jnp.concatenate([centers - halfs, centers + halfs], 1),
                         0.0, 1.0)
        labels = jax.random.randint(k3, (num_objs, 1), 0,
                                    CLASS_NUM - 1).astype(jnp.float32)
        targets.append(jnp.concatenate([boxes, labels], axis=1))

    loss_l, loss_c = loss_fun((loc_list, conf_list), targets, prior_list)
    (loss_l, loss_c) = jax.block_until_ready((loss_l, loss_c))

    ref_l, ref_c = reference_loss((loc_list, conf_list), targets, prior_list)
    ref_l, ref_c = float(ref_l), float(ref_c)
    assert abs(float(loss_l) - ref_l) <= 1e-3 * max(1.0, abs(ref_l)), \
        (float(loss_l), ref_l)
    assert abs(float(loss_c) - ref_c) <= 1e-3 * max(1.0, abs(ref_c)), \
        (float(loss_c), ref_c)

    print("KERNEL_OK")
</pallas_src>

<mosaic_0001>
module attributes {stable_mosaic.version = 11 : i64} {
  func.func @_perbox_kernel(%arg0: i32, %arg1: memref<1x4x8x128xf32, #tpu.memory_space<vmem>>, %arg2: memref<1x4x8x128xf32, #tpu.memory_space<vmem>>, %arg3: memref<1x4x8x128xf32, #tpu.memory_space<vmem>>, %arg4: memref<1x8x128xi32, #tpu.memory_space<vmem>>, %arg5: memref<1x8x128xf32, #tpu.memory_space<vmem>>, %arg6: memref<1x1x1xf32, #tpu.memory_space<vmem>>) attributes {dimension_semantics = [#tpu.dimension_semantics<parallel>], iteration_bounds = array<i64: 2>, scalar_prefetch = 0 : i64, scratch_operands = 0 : i64, tpu.core_type = #tpu.core_type<tc>, window_params = [{transform_indices = @transform_0, window_bounds = array<i64: 1, 4, 8, 128>}, {transform_indices = @transform_1, window_bounds = array<i64: 1, 4, 8, 128>}, {transform_indices = @transform_2, window_bounds = array<i64: 1, 4, 8, 128>}, {transform_indices = @transform_3, window_bounds = array<i64: 1, 8, 128>}, {transform_indices = @transform_4, window_bounds = array<i64: 1, 8, 128>}, {transform_indices = @transform_5, window_bounds = array<i64: 1, 1, 1>}]} {
    %c0 = arith.constant 0 : index
    %c0_0 = arith.constant 0 : index
    %c0_1 = arith.constant 0 : index
    %0 = vector.load %arg4[%c0, %c0_0, %c0_1] : memref<1x8x128xi32, #tpu.memory_space<vmem>>, vector<1x8x128xi32>
    %c0_i32 = arith.constant 0 : i32
    %1 = vector.broadcast %c0_i32 : i32 to vector<1x8x128xi32>
    %2 = arith.cmpi sgt, %0, %1 : vector<1x8x128xi32>
    %3 = arith.extui %2 : vector<1x8x128xi1> to vector<1x8x128xi32>
    %4 = arith.sitofp %3 : vector<1x8x128xi32> to vector<1x8x128xf32>
    %c0_2 = arith.constant 0 : index
    %c0_3 = arith.constant 0 : index
    %c0_4 = arith.constant 0 : index
    %c0_5 = arith.constant 0 : index
    %5 = vector.load %arg1[%c0_2, %c0_3, %c0_4, %c0_5] : memref<1x4x8x128xf32, #tpu.memory_space<vmem>>, vector<1x4x8x128xf32>
    %c0_6 = arith.constant 0 : index
    %c0_7 = arith.constant 0 : index
    %c0_8 = arith.constant 0 : index
    %c0_9 = arith.constant 0 : index
    %6 = vector.load %arg2[%c0_6, %c0_7, %c0_8, %c0_9] : memref<1x4x8x128xf32, #tpu.memory_space<vmem>>, vector<1x4x8x128xf32>
    %7 = vector.extract_strided_slice %5 {offsets = [0, 0, 0, 0], sizes = [1, 1, 8, 128], strides = [1, 1, 1, 1]} : vector<1x4x8x128xf32> to vector<1x1x8x128xf32>
    %8 = vector.shape_cast %7 : vector<1x1x8x128xf32> to vector<1x8x128xf32>
    %9 = vector.extract_strided_slice %6 {offsets = [0, 0, 0, 0], sizes = [1, 1, 8, 128], strides = [1, 1, 1, 1]} : vector<1x4x8x128xf32> to vector<1x1x8x128xf32>
    %10 = vector.shape_cast %9 : vector<1x1x8x128xf32> to vector<1x8x128xf32>
    %11 = arith.subf %8, %10 : vector<1x8x128xf32>
    %12 = math.absf %11 : vector<1x8x128xf32>
    %cst = arith.constant 1.000000e+00 : f32
    %13 = vector.broadcast %cst : f32 to vector<1x8x128xf32>
    %14 = arith.cmpf olt, %12, %13 : vector<1x8x128xf32>
    %cst_10 = arith.constant 5.000000e-01 : f32
    %15 = vector.broadcast %cst_10 : f32 to vector<1x8x128xf32>
    %16 = arith.mulf %15, %11 : vector<1x8x128xf32>
    %17 = arith.mulf %16, %11 : vector<1x8x128xf32>
    %cst_11 = arith.constant 5.000000e-01 : f32
    %18 = vector.broadcast %cst_11 : f32 to vector<1x8x128xf32>
    %19 = arith.subf %12, %18 : vector<1x8x128xf32>
    %20 = arith.select %14, %17, %19 : vector<1x8x128xi1>, vector<1x8x128xf32>
    %21 = vector.extract_strided_slice %5 {offsets = [0, 1, 0, 0], sizes = [1, 1, 8, 128], strides = [1, 1, 1, 1]} : vector<1x4x8x128xf32> to vector<1x1x8x128xf32>
    %22 = vector.shape_cast %21 : vector<1x1x8x128xf32> to vector<1x8x128xf32>
    %23 = vector.extract_strided_slice %6 {offsets = [0, 1, 0, 0], sizes = [1, 1, 8, 128], strides = [1, 1, 1, 1]} : vector<1x4x8x128xf32> to vector<1x1x8x128xf32>
    %24 = vector.shape_cast %23 : vector<1x1x8x128xf32> to vector<1x8x128xf32>
    %25 = arith.subf %22, %24 : vector<1x8x128xf32>
    %26 = math.absf %25 : vector<1x8x128xf32>
    %cst_12 = arith.constant 1.000000e+00 : f32
    %27 = vector.broadcast %cst_12 : f32 to vector<1x8x128xf32>
    %28 = arith.cmpf olt, %26, %27 : vector<1x8x128xf32>
    %cst_13 = arith.constant 5.000000e-01 : f32
    %29 = vector.broadcast %cst_13 : f32 to vector<1x8x128xf32>
    %30 = arith.mulf %29, %25 : vector<1x8x128xf32>
    %31 = arith.mulf %30, %25 : vector<1x8x128xf32>
    %cst_14 = arith.constant 5.000000e-01 : f32
    %32 = vector.broadcast %cst_14 : f32 to vector<1x8x128xf32>
    %33 = arith.subf %26, %32 : vector<1x8x128xf32>
    %34 = arith.select %28, %31, %33 : vector<1x8x128xi1>, vector<1x8x128xf32>
    %35 = arith.addf %20, %34 : vector<1x8x128xf32>
    %36 = vector.extract_strided_slice %5 {offsets = [0, 2, 0, 0], sizes = [1, 1, 8, 128], strides = [1, 1, 1, 1]} : vector<1x4x8x128xf32> to vector<1x1x8x128xf32>
    %37 = vector.shape_cast %36 : vector<1x1x8x128xf32> to vector<1x8x128xf32>
    %38 = vector.extract_strided_slice %6 {offsets = [0, 2, 0, 0], sizes = [1, 1, 8, 128], strides = [1, 1, 1, 1]} : vector<1x4x8x128xf32> to vector<1x1x8x128xf32>
    %39 = vector.shape_cast %38 : vector<1x1x8x128xf32> to vector<1x8x128xf32>
    %40 = arith.subf %37, %39 : vector<1x8x128xf32>
    %41 = math.absf %40 : vector<1x8x128xf32>
    %cst_15 = arith.constant 1.000000e+00 : f32
    %42 = vector.broadcast %cst_15 : f32 to vector<1x8x128xf32>
    %43 = arith.cmpf olt, %41, %42 : vector<1x8x128xf32>
    %cst_16 = arith.constant 5.000000e-01 : f32
    %44 = vector.broadcast %cst_16 : f32 to vector<1x8x128xf32>
    %45 = arith.mulf %44, %40 : vector<1x8x128xf32>
    %46 = arith.mulf %45, %40 : vector<1x8x128xf32>
    %cst_17 = arith.constant 5.000000e-01 : f32
    %47 = vector.broadcast %cst_17 : f32 to vector<1x8x128xf32>
    %48 = arith.subf %41, %47 : vector<1x8x128xf32>
    %49 = arith.select %43, %46, %48 : vector<1x8x128xi1>, vector<1x8x128xf32>
    %50 = arith.addf %35, %49 : vector<1x8x128xf32>
    %51 = vector.extract_strided_slice %5 {offsets = [0, 3, 0, 0], sizes = [1, 1, 8, 128], strides = [1, 1, 1, 1]} : vector<1x4x8x128xf32> to vector<1x1x8x128xf32>
    %52 = vector.shape_cast %51 : vector<1x1x8x128xf32> to vector<1x8x128xf32>
    %53 = vector.extract_strided_slice %6 {offsets = [0, 3, 0, 0], sizes = [1, 1, 8, 128], strides = [1, 1, 1, 1]} : vector<1x4x8x128xf32> to vector<1x1x8x128xf32>
    %54 = vector.shape_cast %53 : vector<1x1x8x128xf32> to vector<1x8x128xf32>
    %55 = arith.subf %52, %54 : vector<1x8x128xf32>
    %56 = math.absf %55 : vector<1x8x128xf32>
    %cst_18 = arith.constant 1.000000e+00 : f32
    %57 = vector.broadcast %cst_18 : f32 to vector<1x8x128xf32>
    %58 = arith.cmpf olt, %56, %57 : vector<1x8x128xf32>
    %cst_19 = arith.constant 5.000000e-01 : f32
    %59 = vector.broadcast %cst_19 : f32 to vector<1x8x128xf32>
    %60 = arith.mulf %59, %55 : vector<1x8x128xf32>
    %61 = arith.mulf %60, %55 : vector<1x8x128xf32>
    %cst_20 = arith.constant 5.000000e-01 : f32
    %62 = vector.broadcast %cst_20 : f32 to vector<1x8x128xf32>
    %63 = arith.subf %56, %62 : vector<1x8x128xf32>
    %64 = arith.select %58, %61, %63 : vector<1x8x128xi1>, vector<1x8x128xf32>
    %65 = arith.addf %50, %64 : vector<1x8x128xf32>
    %cst_21 = arith.constant 0.000000e+00 : f32
    %66 = vector.broadcast %cst_21 : f32 to vector<1x1x1xf32>
    %67 = arith.mulf %65, %4 : vector<1x8x128xf32>
    %68 = vector.shape_cast %67 : vector<1x8x128xf32> to vector<1x1x8x128xf32>
    %cst_22 = arith.constant dense<0.000000e+00> : vector<1xf32>
    %69 = vector.multi_reduction <add>, %68, %cst_22 [1, 2, 3] : vector<1x1x8x128xf32> to vector<1xf32>
    %70 = vector.shape_cast %69 : vector<1xf32> to vector<1x1x1x1xf32>
    %71 = vector.extract %70[0, 0, 0, 0] : f32 from vector<1x1x1x1xf32>
    %72 = vector.broadcast %71 : f32 to vector<1x1x1xf32>
    %73 = arith.addf %66, %72 : vector<1x1x1xf32>
    %c0_23 = arith.constant 0 : index
    %c0_24 = arith.constant 0 : index
    %c0_25 = arith.constant 0 : index
    %74 = vector.load %arg6[%c0_23, %c0_24, %c0_25] : memref<1x1x1xf32, #tpu.memory_space<vmem>>, vector<1x1x1xf32>
    tpu.vector_store %arg6[%c0_23, %c0_24, %c0_25], %73 {strides = array<i32>} : memref<1x1x1xf32, #tpu.memory_space<vmem>>, vector<1x1x1xf32>,
    %c0_26 = arith.constant 0 : index
    %c0_27 = arith.constant 0 : index
    %c0_28 = arith.constant 0 : index
    %c0_29 = arith.constant 0 : index
    %75 = vector.load %arg3[%c0_26, %c0_27, %c0_28, %c0_29] : memref<1x4x8x128xf32, #tpu.memory_space<vmem>>, vector<1x4x8x128xf32>
    %76 = vector.extract_strided_slice %75 {offsets = [0, 0, 0, 0], sizes = [1, 1, 8, 128], strides = [1, 1, 1, 1]} : vector<1x4x8x128xf32> to vector<1x1x8x128xf32>
    %77 = vector.shape_cast %76 : vector<1x1x8x128xf32> to vector<1x8x128xf32>
    %78 = vector.extract_strided_slice %75 {offsets = [0, 1, 0, 0], sizes = [1, 1, 8, 128], strides = [1, 1, 1, 1]} : vector<1x4x8x128xf32> to vector<1x1x8x128xf32>
    %79 = vector.shape_cast %78 : vector<1x1x8x128xf32> to vector<1x8x128xf32>
    %80 = arith.maximumf %77, %79 : vector<1x8x128xf32>
    %81 = vector.extract_strided_slice %75 {offsets = [0, 2, 0, 0], sizes = [1, 1, 8, 128], strides = [1, 1, 1, 1]} : vector<1x4x8x128xf32> to vector<1x1x8x128xf32>
    %82 = vector.shape_cast %81 : vector<1x1x8x128xf32> to vector<1x8x128xf32>
    %83 = arith.maximumf %80, %82 : vector<1x8x128xf32>
    %84 = vector.extract_strided_slice %75 {offsets = [0, 3, 0, 0], sizes = [1, 1, 8, 128], strides = [1, 1, 1, 1]} : vector<1x4x8x128xf32> to vector<1x1x8x128xf32>
    %85 = vector.shape_cast %84 : vector<1x1x8x128xf32> to vector<1x8x128xf32>
    %86 = arith.maximumf %83, %85 : vector<1x8x128xf32>
    %cst_30 = arith.constant 0.000000e+00 : f32
    %87 = vector.broadcast %cst_30 : f32 to vector<1x8x128xf32>
    %cst_31 = arith.constant 0.000000e+00 : f32
    %88 = vector.broadcast %cst_31 : f32 to vector<1x8x128xf32>
    %89 = vector.extract_strided_slice %75 {offsets = [0, 0, 0, 0], sizes = [1, 1, 8, 128], strides = [1, 1, 1, 1]} : vector<1x4x8x128xf32> to vector<1x1x8x128xf32>
    %90 = vector.shape_cast %89 : vector<1x1x8x128xf32> to vector<1x8x128xf32>
    %91 = arith.subf %90, %86 : vector<1x8x128xf32>
    %92 = math.exp %91 : vector<1x8x128xf32>
    %93 = arith.addf %87, %92 : vector<1x8x128xf32>
    %c0_i32_32 = arith.constant 0 : i32
    %94 = vector.broadcast %c0_i32_32 : i32 to vector<1x8x128xi32>
    %95 = arith.cmpi eq, %0, %94 : vector<1x8x128xi32>
    %cst_33 = arith.constant 0.000000e+00 : f32
    %96 = vector.broadcast %cst_33 : f32 to vector<1x8x128xf32>
    %97 = arith.select %95, %90, %96 : vector<1x8x128xi1>, vector<1x8x128xf32>
    %98 = arith.addf %88, %97 : vector<1x8x128xf32>
    %99 = vector.extract_strided_slice %75 {offsets = [0, 1, 0, 0], sizes = [1, 1, 8, 128], strides = [1, 1, 1, 1]} : vector<1x4x8x128xf32> to vector<1x1x8x128xf32>
    %100 = vector.shape_cast %99 : vector<1x1x8x128xf32> to vector<1x8x128xf32>
    %101 = arith.subf %100, %86 : vector<1x8x128xf32>
    %102 = math.exp %101 : vector<1x8x128xf32>
    %103 = arith.addf %93, %102 : vector<1x8x128xf32>
    %c1_i32 = arith.constant 1 : i32
    %104 = vector.broadcast %c1_i32 : i32 to vector<1x8x128xi32>
    %105 = arith.cmpi eq, %0, %104 : vector<1x8x128xi32>
    %cst_34 = arith.constant 0.000000e+00 : f32
    %106 = vector.broadcast %cst_34 : f32 to vector<1x8x128xf32>
    %107 = arith.select %105, %100, %106 : vector<1x8x128xi1>, vector<1x8x128xf32>
    %108 = arith.addf %98, %107 : vector<1x8x128xf32>
    %109 = vector.extract_strided_slice %75 {offsets = [0, 2, 0, 0], sizes = [1, 1, 8, 128], strides = [1, 1, 1, 1]} : vector<1x4x8x128xf32> to vector<1x1x8x128xf32>
    %110 = vector.shape_cast %109 : vector<1x1x8x128xf32> to vector<1x8x128xf32>
    %111 = arith.subf %110, %86 : vector<1x8x128xf32>
    %112 = math.exp %111 : vector<1x8x128xf32>
    %113 = arith.addf %103, %112 : vector<1x8x128xf32>
    %c2_i32 = arith.constant 2 : i32
    %114 = vector.broadcast %c2_i32 : i32 to vector<1x8x128xi32>
    %115 = arith.cmpi eq, %0, %114 : vector<1x8x128xi32>
    %cst_35 = arith.constant 0.000000e+00 : f32
    %116 = vector.broadcast %cst_35 : f32 to vector<1x8x128xf32>
    %117 = arith.select %115, %110, %116 : vector<1x8x128xi1>, vector<1x8x128xf32>
    %118 = arith.addf %108, %117 : vector<1x8x128xf32>
    %119 = vector.extract_strided_slice %75 {offsets = [0, 3, 0, 0], sizes = [1, 1, 8, 128], strides = [1, 1, 1, 1]} : vector<1x4x8x128xf32> to vector<1x1x8x128xf32>
    %120 = vector.shape_cast %119 : vector<1x1x8x128xf32> to vector<1x8x128xf32>
    %121 = arith.subf %120, %86 : vector<1x8x128xf32>
    %122 = math.exp %121 : vector<1x8x128xf32>
    %123 = arith.addf %113, %122 : vector<1x8x128xf32>
    %c3_i32 = arith.constant 3 : i32
    %124 = vector.broadcast %c3_i32 : i32 to vector<1x8x128xi32>
    %125 = arith.cmpi eq, %0, %124 : vector<1x8x128xi32>
    %cst_36 = arith.constant 0.000000e+00 : f32
    %126 = vector.broadcast %cst_36 : f32 to vector<1x8x128xf32>
    %127 = arith.select %125, %120, %126 : vector<1x8x128xi1>, vector<1x8x128xf32>
    %128 = arith.addf %118, %127 : vector<1x8x128xf32>
    %129 = math.log %123 : vector<1x8x128xf32>
    %130 = arith.addf %129, %86 : vector<1x8x128xf32>
    %131 = arith.subf %130, %128 : vector<1x8x128xf32>
    %c0_37 = arith.constant 0 : index
    %c0_38 = arith.constant 0 : index
    %c0_39 = arith.constant 0 : index
    %132 = vector.load %arg5[%c0_37, %c0_38, %c0_39] : memref<1x8x128xf32, #tpu.memory_space<vmem>>, vector<1x8x128xf32>
    tpu.vector_store %arg5[%c0_37, %c0_38, %c0_39], %131 {strides = array<i32>} : memref<1x8x128xf32, #tpu.memory_space<vmem>>, vector<1x8x128xf32>,
    return
  }
  func.func @transform_0(%arg0: i32) -> (i32, i32, i32, i32) {
    %c0_i32 = arith.constant 0 : i32
    %c0_i32_0 = arith.constant 0 : i32
    %c0_i32_1 = arith.constant 0 : i32
    %c0_i32_2 = arith.constant 0 : i32
    return %arg0, %c0_i32, %c0_i32_0, %c0_i32_1 : i32, i32, i32, i32
  }
  func.func @transform_1(%arg0: i32) -> (i32, i32, i32, i32) {
    %c0_i32 = arith.constant 0 : i32
    %c0_i32_0 = arith.constant 0 : i32
    %c0_i32_1 = arith.constant 0 : i32
    %c0_i32_2 = arith.constant 0 : i32
    return %arg0, %c0_i32, %c0_i32_0, %c0_i32_1 : i32, i32, i32, i32
  }
  func.func @transform_2(%arg0: i32) -> (i32, i32, i32, i32) {
    %c0_i32 = arith.constant 0 : i32
    %c0_i32_0 = arith.constant 0 : i32
    %c0_i32_1 = arith.constant 0 : i32
    %c0_i32_2 = arith.constant 0 : i32
    return %arg0, %c0_i32, %c0_i32_0, %c0_i32_1 : i32, i32, i32, i32
  }
  func.func @transform_3(%arg0: i32) -> (i32, i32, i32) {
    %c0_i32 = arith.constant 0 : i32
    %c0_i32_0 = arith.constant 0 : i32
    %c0_i32_1 = arith.constant 0 : i32
    return %arg0, %c0_i32, %c0_i32_0 : i32, i32, i32
  }
  func.func @transform_4(%arg0: i32) -> (i32, i32, i32) {
    %c0_i32 = arith.constant 0 : i32
    %c0_i32_0 = arith.constant 0 : i32
    %c0_i32_1 = arith.constant 0 : i32
    return %arg0, %c0_i32, %c0_i32_0 : i32, i32, i32
  }
  func.func @transform_5(%arg0: i32) -> (i32, i32, i32) {
    %c0_i32 = arith.constant 0 : i32
    %c0_i32_0 = arith.constant 0 : i32
    %c0_i32_1 = arith.constant 0 : i32
    return %arg0, %c0_i32, %c0_i32_0 : i32, i32, i32
  }
}

</mosaic_0001>

<llo_original>
// kernel: tpu_custom_call.1
$region0: #{tpu_custom_call.1}
  #allocation0 [shape = 'u32[]', space=smem, size = 0x4, offset = 0x4, fixed_abs, tag = 'smem constant byte address 0x4 - core index']
  #allocation1 [shape = 'u32[144,128]{1,0:T(1,128)}', space=vmem, size = 0x12000, scoped, tag = 'internal scratch']
  %s0 = inlined_call_operand.hbm [shape: f32[2,4,8,128], index: 0, kind: input, shape index: {}]
  %s1 = inlined_call_operand.hbm [shape: f32[2,4,8,128], index: 1, kind: input, shape index: {}]
  %s2 = inlined_call_operand.hbm [shape: f32[2,4,8,128], index: 2, kind: input, shape index: {}]
  %s3 = inlined_call_operand.hbm [shape: s32[2,8,128], index: 3, kind: input, shape index: {}]
  %s4 = inlined_call_operand.hbm [shape: f32[2,8,128], index: 4, kind: output, shape index: {0}]
  %s5 = inlined_call_operand.vmem [shape: f32[2,1,1], index: 5, kind: output, shape index: {1}]
  %6 = xla_tuple %s4, %s5
  %s7 = sld [smem:[#allocation0]]
  $region73: #{tpu_custom_call.1} parent=0
    _
  %s9 = ssub.s32 1, %s7
  %s10 = scalar_select 0, %s9, %s7
  $region1: #{tpu_custom_call.1} parent=0
    #allocation2 [shape = 'u8[32768]{0}', space=vmem, size = 0x8000, scoped, tag = 'input window, operand 0']
    #allocation3 [shape = 's32[2]{0}', space=sflag, size = 0x8, scoped, tag = 'scoped memory for tpu_custom_call.1']
    #allocation4 [shape = 's32[2]{0}', space=sflag, size = 0x8, scoped, tag = 'scoped memory for tpu_custom_call.1']
    #allocation5 [shape = 'u8[32768]{0}', space=vmem, size = 0x8000, scoped, tag = 'input window, operand 1']
    #allocation6 [shape = 's32[2]{0}', space=sflag, size = 0x8, scoped, tag = 'scoped memory for tpu_custom_call.1']
    #allocation7 [shape = 'u8[32768]{0}', space=vmem, size = 0x8000, scoped, tag = 'input window, operand 2']
    #allocation8 [shape = 'u8[8192]{0}', space=vmem, size = 0x2000, scoped, tag = 'input window, operand 3']
    #allocation9 [shape = 's32[2]{0}', space=sflag, size = 0x8, scoped, tag = 'scoped memory for tpu_custom_call.1']
    #allocation10 [shape = 'u8[8192]{0}', space=vmem, size = 0x2000, scoped, tag = 'output window, operand 0']
    %11 = vsyncpa [#allocation3], 0
    %s12 = scalar_lea.sflag [#allocation3], 1
    %13 = vsyncpa %s12, 0
    %14 = vsyncpa [#allocation6], 0
    %s15 = scalar_lea.sflag [#allocation6], 1
    %16 = vsyncpa %s15, 0
    %17 = vsyncpa [#allocation9], 0
    %s18 = scalar_lea.sflag [#allocation9], 1
    %19 = vsyncpa %s18, 0
    %20 = vsyncpa [#allocation4], 0
    %s21 = scalar_lea.sflag [#allocation4], 1
    %22 = vsyncpa %s21, 0
    loop: start=0, step=1, limit=4
    $region2: #{tpu_custom_call.1} parent=1 // loop_pre_header
      _
    $region3: #{tpu_custom_call.1} parent=1 // loop_header
      %s24 = sphi 0, %s28
      %p25 = scmp.ge.s32.totalorder %s24, 4
      %s34 = sphi 0, %s36
      %s37 = sphi 0, %s34
      %s38 = sphi 0, %s37
      %s54 = sphi 0, %s38
      %s60 = sphi 0, %s62
      %s63 = sphi 0, %s60
      %s64 = sphi 0, %s63
      %s80 = sphi 0, %s64
      %s86 = sphi 0, %s88
      %s89 = sphi 0, %s86
      %s90 = sphi 0, %s89
      %s106 = sphi 0, %s90
      %s112 = sphi 0, %s114
      %s115 = sphi 0, %s112
      %s116 = sphi 0, %s115
      %s132 = sphi 0, %s116
      %s138 = sphi 0, %s140
      %s141 = sphi 0, %s138
      %s142 = sphi 0, %s141
      %s158 = sphi 0, %s142
      %s164 = sphi 0, %s166
      %s167 = sphi 0, %s164
      %s168 = sphi 0, %s167
      %s184 = sphi 0, %s168
    $region4: #{tpu_custom_call.1} parent=1 // loop_header_branch
      %27 = sbr.rel (%p25) target = $region8
    $region5: #{tpu_custom_call.1} parent=1 // loop_body
      %s29 = ssub.s32 %s24, 1
      %s30 = ssub.s32 %s24, 2
      %s31 = sadd.s32 %s24, 1
      %s32 = ssub.s32 %s24, %s31
      %p33 = scmp.eq.s32.totalorder %s32, 0
      %s35 = sadd.s32 %s34, 1
      %s36 = scalar_select %p33, %s34, %s35
      %p39 = pneg %p33
      %p40 = scmp.eq.s32.totalorder %s24, 1
      %p41 = por %p39, %p40
      %p42 = scmp.ne.s32.totalorder %s34, %s37
      %p43 = scmp.eq.s32.totalorder %s24, 0
      %p44 = por %p42, %p43
      %p45 = scmp.ne.s32.totalorder %s34, %s37
      %p46 = scmp.eq.s32.totalorder %s29, 1
      %p47 = por %p45, %p46
      %p48 = scmp.ne.s32.totalorder %s37, %s38
      %p49 = scmp.eq.s32.totalorder %s29, 0
      %p50 = por %p48, %p49
      %p51 = scmp.ne.s32.totalorder %s37, %s38
      %p52 = scmp.eq.s32.totalorder %s30, 1
      %p53 = por %p51, %p52
      %p55 = scmp.ne.s32.totalorder %s38, %s54
      %p56 = scmp.eq.s32.totalorder %s30, 0
      %p57 = por %p55, %p56
      %s58 = ssub.s32 %s24, %s31
      %p59 = scmp.eq.s32.totalorder %s58, 0
      %s61 = sadd.s32 %s60, 1
      %s62 = scalar_select %p59, %s60, %s61
      %p65 = pneg %p59
      %p66 = scmp.eq.s32.totalorder %s24, 1
      %p67 = por %p65, %p66
      %p68 = scmp.ne.s32.totalorder %s60, %s63
      %p69 = scmp.eq.s32.totalorder %s24, 0
      %p70 = por %p68, %p69
      %p71 = scmp.ne.s32.totalorder %s60, %s63
      %p72 = scmp.eq.s32.totalorder %s29, 1
      %p73 = por %p71, %p72
      %p74 = scmp.ne.s32.totalorder %s63, %s64
      %p75 = scmp.eq.s32.totalorder %s29, 0
      %p76 = por %p74, %p75
      %p77 = scmp.ne.s32.totalorder %s63, %s64
      %p78 = scmp.eq.s32.totalorder %s30, 1
      %p79 = por %p77, %p78
      %p81 = scmp.ne.s32.totalorder %s64, %s80
      %p82 = scmp.eq.s32.totalorder %s30, 0
      %p83 = por %p81, %p82
      %s84 = ssub.s32 %s24, %s31
      %p85 = scmp.eq.s32.totalorder %s84, 0
      %s87 = sadd.s32 %s86, 1
      %s88 = scalar_select %p85, %s86, %s87
      %p91 = pneg %p85
      %p92 = scmp.eq.s32.totalorder %s24, 1
      %p93 = por %p91, %p92
      %p94 = scmp.ne.s32.totalorder %s86, %s89
      %p95 = scmp.eq.s32.totalorder %s24, 0
      %p96 = por %p94, %p95
      %p97 = scmp.ne.s32.totalorder %s86, %s89
      %p98 = scmp.eq.s32.totalorder %s29, 1
      %p99 = por %p97, %p98
      %p100 = scmp.ne.s32.totalorder %s89, %s90
      %p101 = scmp.eq.s32.totalorder %s29, 0
      %p102 = por %p100, %p101
      %p103 = scmp.ne.s32.totalorder %s89, %s90
      %p104 = scmp.eq.s32.totalorder %s30, 1
      %p105 = por %p103, %p104
      %p107 = scmp.ne.s32.totalorder %s90, %s106
      %p108 = scmp.eq.s32.totalorder %s30, 0
      %p109 = por %p107, %p108
      %s110 = ssub.s32 %s24, %s31
      %p111 = scmp.eq.s32.totalorder %s110, 0
      %s113 = sadd.s32 %s112, 1
      %s114 = scalar_select %p111, %s112, %s113
      %p117 = pneg %p111
      %p118 = scmp.eq.s32.totalorder %s24, 1
      %p119 = por %p117, %p118
      %p120 = scmp.ne.s32.totalorder %s112, %s115
      %p121 = scmp.eq.s32.totalorder %s24, 0
      %p122 = por %p120, %p121
      %p123 = scmp.ne.s32.totalorder %s112, %s115
      %p124 = scmp.eq.s32.totalorder %s29, 1
      %p125 = por %p123, %p124
      %p126 = scmp.ne.s32.totalorder %s115, %s116
      %p127 = scmp.eq.s32.totalorder %s29, 0
      %p128 = por %p126, %p127
      %p129 = scmp.ne.s32.totalorder %s115, %s116
      %p130 = scmp.eq.s32.totalorder %s30, 1
      %p131 = por %p129, %p130
      %p133 = scmp.ne.s32.totalorder %s116, %s132
      %p134 = scmp.eq.s32.totalorder %s30, 0
      %p135 = por %p133, %p134
      %s136 = ssub.s32 %s24, %s31
      %p137 = scmp.eq.s32.totalorder %s136, 0
      %s139 = sadd.s32 %s138, 1
      %s140 = scalar_select %p137, %s138, %s139
      %p143 = pneg %p137
      %p144 = scmp.eq.s32.totalorder %s24, 1
      %p145 = por %p143, %p144
      %p146 = scmp.ne.s32.totalorder %s138, %s141
      %p147 = scmp.eq.s32.totalorder %s24, 0
      %p148 = por %p146, %p147
      %p149 = scmp.ne.s32.totalorder %s138, %s141
      %p150 = scmp.eq.s32.totalorder %s29, 1
      %p151 = por %p149, %p150
      %p152 = scmp.ne.s32.totalorder %s141, %s142
      %p153 = scmp.eq.s32.totalorder %s29, 0
      %p154 = por %p152, %p153
      %p155 = scmp.ne.s32.totalorder %s141, %s142
      %p156 = scmp.eq.s32.totalorder %s30, 1
      %p157 = por %p155, %p156
      %p159 = scmp.ne.s32.totalorder %s142, %s158
      %p160 = scmp.eq.s32.totalorder %s30, 0
      %p161 = por %p159, %p160
      %s162 = ssub.s32 %s24, %s31
      %p163 = scmp.eq.s32.totalorder %s162, 0
      %s165 = sadd.s32 %s164, 1
      %s166 = scalar_select %p163, %s164, %s165
      %p169 = pneg %p163
      %p170 = scmp.eq.s32.totalorder %s24, 1
      %p171 = por %p169, %p170
      %p172 = scmp.ne.s32.totalorder %s164, %s167
      %p173 = scmp.eq.s32.totalorder %s24, 0
      %p174 = por %p172, %p173
      %p175 = scmp.ne.s32.totalorder %s164, %s167
      %p176 = scmp.eq.s32.totalorder %s29, 1
      %p177 = por %p175, %p176
      %p178 = scmp.ne.s32.totalorder %s167, %s168
      %p179 = scmp.eq.s32.totalorder %s29, 0
      %p180 = por %p178, %p179
      %p181 = scmp.ne.s32.totalorder %s167, %s168
      %p182 = scmp.eq.s32.totalorder %s30, 1
      %p183 = por %p181, %p182
      %p185 = scmp.ne.s32.totalorder %s168, %s184
      %p186 = scmp.eq.s32.totalorder %s30, 0
      %p187 = por %p185, %p186
      %p188 = scmp.le.s32.totalorder 1, %s24
      %p189 = scmp.lt.s32.totalorder %s24, 3
      %p190 = pnand %p188, %p189
      %p191 = pneg %p190
      // Predicated region
      $region9: #{tpu_custom_call.1} parent=5 // pred_check
        _
      $region10: #{tpu_custom_call.1} parent=5 // pred_check_branch
        %193 = sbr.rel (%p190) target = $region12
      $region11: #{tpu_custom_call.1} parent=5 // pred_region
        %s194 = ssub.s32 %s24, 1
      $region12: #{tpu_custom_call.1} parent=5 // pred_fallthru
        _
      %p195 = scmp.lt.s32.totalorder %s24, 2
      // Predicated region
      $region13: #{tpu_custom_call.1} parent=5 // pred_check
        %p196 = pneg %p195
      $region14: #{tpu_custom_call.1} parent=5 // pred_check_branch
        %198 = sbr.rel (%p196) target = $region16
      $region15: #{tpu_custom_call.1} parent=5 // pred_region
        // Predicated region
        $region17: #{tpu_custom_call.1} parent=15 // pred_check
          %p199 = pneg %p44
        $region18: #{tpu_custom_call.1} parent=15 // pred_check_branch
          %201 = sbr.rel (%p199) target = $region20
        $region19: #{tpu_custom_call.1} parent=15 // pred_region
          %s202 = sand.u32 %s34, 1
          %s203 = scalar_lea.sflag [#allocation3], %s202
          %s204 = sand.u32 %s34, 1
          %s205 = smul.addr %s204, 32
          %s206 = scalar_lea.vmem [#allocation2], %s205
          %s208 = ssub.s32 512, 512
          %209 = vsyncadd %s203, %s208
          %s210 = smul.addr %s24, 4
          %s211 = smul.addr %s210, 128
          %s212 = scalar_lea.hbm %s0, %s211
          %s213 = sshll.u32 %s206, 4
          %s214 = int_to_ptr.vmem [resolvable:$true] %s213
          %219 = dma.hbm_to_vmem [thread:$0]  %s212, 512, %s214, %s203, 128, 128, 8
        $region20: #{tpu_custom_call.1} parent=15 // pred_fallthru
          _
        // Predicated region
        $region21: #{tpu_custom_call.1} parent=15 // pred_check
          %p220 = pneg %p70
        $region22: #{tpu_custom_call.1} parent=15 // pred_check_branch
          %222 = sbr.rel (%p220) target = $region24
        $region23: #{tpu_custom_call.1} parent=15 // pred_region
          %s223 = sand.u32 %s24, 1
          %s224 = scalar_lea.sflag [#allocation6], %s223
          %s225 = sand.u32 %s60, 1
          %s226 = smul.addr %s225, 32
          %s227 = scalar_lea.vmem [#allocation5], %s226
          %s229 = ssub.s32 512, 512
          %230 = vsyncadd %s224, %s229
          %s231 = smul.addr %s24, 4
          %s232 = smul.addr %s231, 128
          %s233 = scalar_lea.hbm %s1, %s232
          %s234 = sshll.u32 %s227, 4
          %s235 = int_to_ptr.vmem [resolvable:$true] %s234
          %240 = dma.hbm_to_vmem [thread:$0]  %s233, 512, %s235, %s224, 128, 128, 8
        $region24: #{tpu_custom_call.1} parent=15 // pred_fallthru
          _
        // Predicated region
        $region25: #{tpu_custom_call.1} parent=15 // pred_check
          %p241 = pneg %p96
        $region26: #{tpu_custom_call.1} parent=15 // pred_check_branch
          %243 = sbr.rel (%p241) target = $region28
        $region27: #{tpu_custom_call.1} parent=15 // pred_region
          %s244 = sand.u32 %s24, 1
          %s245 = scalar_lea.sflag [#allocation6], %s244
          %s246 = sand.u32 %s86, 1
          %s247 = smul.addr %s246, 32
          %s248 = scalar_lea.vmem [#allocation7], %s247
          %s250 = ssub.s32 512, 512
          %251 = vsyncadd %s245, %s250
          %s252 = smul.addr %s24, 4
          %s253 = smul.addr %s252, 128
          %s254 = scalar_lea.hbm %s2, %s253
          %s255 = sshll.u32 %s248, 4
          %s256 = int_to_ptr.vmem [resolvable:$true] %s255
          %261 = dma.hbm_to_vmem [thread:$0]  %s254, 512, %s256, %s245, 128, 128, 8
        $region28: #{tpu_custom_call.1} parent=15 // pred_fallthru
          _
        // Predicated region
        $region29: #{tpu_custom_call.1} parent=15 // pred_check
          %p262 = pneg %p122
        $region30: #{tpu_custom_call.1} parent=15 // pred_check_branch
          %264 = sbr.rel (%p262) target = $region32
        $region31: #{tpu_custom_call.1} parent=15 // pred_region
          %s265 = sand.u32 %s112, 1
          %s266 = scalar_lea.sflag [#allocation9], %s265
          %s267 = sand.u32 %s112, 1
          %s268 = smul.addr %s267, 8
          %s269 = scalar_lea.vmem [#allocation8], %s268
          %s271 = ssub.s32 128, 128
          %272 = vsyncadd %s266, %s271
          %s273 = smul.addr %s24, 128
          %s274 = scalar_lea.hbm %s3, %s273
          %s276 = sshll.u32 %s269, 4
          %s277 = int_to_ptr.vmem [resolvable:$true] %s276
          %279 = dma.hbm_to_vmem [thread:$0]  %s274, 128, %s277, %s266
        $region32: #{tpu_custom_call.1} parent=15 // pred_fallthru
          _
      $region16: #{tpu_custom_call.1} parent=5 // pred_fallthru
        _
      %p280 = scmp.le.s32.totalorder 1, %s24
      %p281 = scmp.lt.s32.totalorder %s24, 3
      %p282 = pnand %p280, %p281
      %p283 = pneg %p282
      // Predicated region
      $region33: #{tpu_custom_call.1} parent=5 // pred_check
        _
      $region34: #{tpu_custom_call.1} parent=5 // pred_check_branch
        %285 = sbr.rel (%p282) target = $region36
      $region35: #{tpu_custom_call.1} parent=5 // pred_region
        %s286 = ssub.s32 %s24, 1
        %s287 = sand.u32 %s37, 1
        %s288 = scalar_lea.sflag [#allocation3], %s287
        %s289 = sand.u32 %s37, 1
        %s290 = smul.addr %s289, 32
        %s291 = scalar_lea.vmem [#allocation2], %s290
        // Predicated region
        $region37: #{tpu_custom_call.1} parent=35 // pred_check
          %p292 = pneg %p50
        $region38: #{tpu_custom_call.1} parent=35 // pred_check_branch
          %294 = sbr.rel (%p292) target = $region40
        $region39: #{tpu_custom_call.1} parent=35 // pred_region
          %295 = dma.done %s288, 512
        $region40: #{tpu_custom_call.1} parent=35 // pred_fallthru
          _
        %s296 = sand.u32 %s29, 1
        %s297 = scalar_lea.sflag [#allocation6], %s296
        %s298 = sand.u32 %s63, 1
        %s299 = smul.addr %s298, 32
        %s300 = scalar_lea.vmem [#allocation5], %s299
        // Predicated region
        $region41: #{tpu_custom_call.1} parent=35 // pred_check
          %p301 = pneg %p76
        $region42: #{tpu_custom_call.1} parent=35 // pred_check_branch
          %303 = sbr.rel (%p301) target = $region44
        $region43: #{tpu_custom_call.1} parent=35 // pred_region
          %304 = dma.done %s297, 512
        $region44: #{tpu_custom_call.1} parent=35 // pred_fallthru
          _
        %s305 = sand.u32 %s29, 1
        %s306 = scalar_lea.sflag [#allocation6], %s305
        %s307 = sand.u32 %s89, 1
        %s308 = smul.addr %s307, 32
        %s309 = scalar_lea.vmem [#allocation7], %s308
        // Predicated region
        $region45: #{tpu_custom_call.1} parent=35 // pred_check
          %p310 = pneg %p102
        $region46: #{tpu_custom_call.1} parent=35 // pred_check_branch
          %312 = sbr.rel (%p310) target = $region48
        $region47: #{tpu_custom_call.1} parent=35 // pred_region
          %313 = dma.done %s306, 512
        $region48: #{tpu_custom_call.1} parent=35 // pred_fallthru
          _
        %s314 = sand.u32 %s115, 1
        %s315 = scalar_lea.sflag [#allocation9], %s314
        %s316 = sand.u32 %s115, 1
        %s317 = smul.addr %s316, 8
        %s318 = scalar_lea.vmem [#allocation8], %s317
        // Predicated region
        $region49: #{tpu_custom_call.1} parent=35 // pred_check
          %p319 = pneg %p128
        $region50: #{tpu_custom_call.1} parent=35 // pred_check_branch
          %321 = sbr.rel (%p319) target = $region52
        $region51: #{tpu_custom_call.1} parent=35 // pred_region
          %322 = dma.done %s315, 128
        $region52: #{tpu_custom_call.1} parent=35 // pred_fallthru
          _
        %s323 = sand.u32 %s37, 1
        %s324 = scalar_lea.sflag [#allocation3], %s323
        %s325 = sand.u32 %s37, 1
        %s326 = smul.addr %s325, 32
        %s327 = scalar_lea.vmem [#allocation2], %s326
        %p328 = pneg %p50
        %p329 = pneg %p47
        %s330 = sand.u32 %s29, 1
        %s331 = scalar_lea.sflag [#allocation6], %s330
        %s332 = sand.u32 %s63, 1
        %s333 = smul.addr %s332, 32
        %s334 = scalar_lea.vmem [#allocation5], %s333
        %p335 = pneg %p76
        %p336 = pneg %p73
        %s337 = sand.u32 %s29, 1
        %s338 = scalar_lea.sflag [#allocation6], %s337
        %s339 = sand.u32 %s89, 1
        %s340 = smul.addr %s339, 32
        %s341 = scalar_lea.vmem [#allocation7], %s340
        %p342 = pneg %p102
        %p343 = pneg %p99
        %s344 = sand.u32 %s115, 1
        %s345 = scalar_lea.sflag [#allocation9], %s344
        %s346 = sand.u32 %s115, 1
        %s347 = smul.addr %s346, 8
        %s348 = scalar_lea.vmem [#allocation8], %s347
        %p349 = pneg %p128
        %p350 = pneg %p125
        %p351 = pneg %p154
        %p352 = pneg %p151
        %s353 = sand.u32 %s141, 1
        %s354 = scalar_lea.sflag [#allocation4], %s353
        %s355 = sand.u32 %s141, 1
        %s356 = smul.addr %s355, 8
        %s357 = scalar_lea.vmem [#allocation10], %s356
        %p358 = pneg %p180
        %p359 = pneg %p177
        %p360 = scmp.lt.s32.totalorder %s29, 1
        %s361 = scalar_select %p360, %s29, 1
        %s362 = scalar_lea.vmem %s5, %s361
        %p363 = scmp.lt.s32.totalorder %s29, 1
        %s364 = scalar_select %p363, %s29, 1
        %s365 = scalar_lea.vmem %s5, %s364
        %v366 = vld [vmem:[%s318] sm:$0xff]
        %vm367 = vcmp.gt.s32.totalorder %v366, 0
        %v368 = vsel %vm367, 1, 0
        %v369 = vcvt.s32.f32 %v368
        %v370 = vld [vmem:[%s291] sm:$0xff]
        %v371 = vld [vmem:[%s291 + $0x8] sm:$0xff]
        %v372 = vld [vmem:[%s291 + $0x10] sm:$0xff]
        %v373 = vld [vmem:[%s291 + $0x18] sm:$0xff]
        %v374 = vld [vmem:[%s300] sm:$0xff]
        %v375 = vld [vmem:[%s300 + $0x8] sm:$0xff]
        %v376 = vld [vmem:[%s300 + $0x10] sm:$0xff]
        %v377 = vld [vmem:[%s300 + $0x18] sm:$0xff]
        %v378 = vsub.f32 %v370, %v374
        %v379 = vand.u32 2147483647, %v378
        %vm380 = vcmp.lt.f32.partialorder %v379, 1.0
        %v381 = vmul.f32 %v378, 0.5
        %v382 = vmul.f32 %v381, %v378
        %v383 = vsub.f32 %v379, 0.5
        %v384 = vsel %vm380, %v382, %v383
        %v385 = vsub.f32 %v371, %v375
        %v386 = vand.u32 2147483647, %v385
        %vm387 = vcmp.lt.f32.partialorder %v386, 1.0
        %v388 = vmul.f32 %v385, 0.5
        %v389 = vmul.f32 %v388, %v385
        %v390 = vsub.f32 %v386, 0.5
        %v391 = vsel %vm387, %v389, %v390
        %v392 = vadd.f32 %v384, %v391
        %v393 = vsub.f32 %v372, %v376
        %v394 = vand.u32 2147483647, %v393
        %vm395 = vcmp.lt.f32.partialorder %v394, 1.0
        %v396 = vmul.f32 %v393, 0.5
        %v397 = vmul.f32 %v396, %v393
        %v398 = vsub.f32 %v394, 0.5
        %v399 = vsel %vm395, %v397, %v398
        %v400 = vadd.f32 %v392, %v399
        %v401 = vsub.f32 %v373, %v377
        %v402 = vand.u32 2147483647, %v401
        %vm403 = vcmp.lt.f32.partialorder %v402, 1.0
        %v404 = vmul.f32 %v401, 0.5
        %v405 = vmul.f32 %v404, %v401
        %v406 = vsub.f32 %v402, 0.5
        %v407 = vsel %vm403, %v405, %v406
        %v408 = vadd.f32 %v400, %v407
        %v409 = vmul.f32 %v408, %v369
        %410 = vadd.xlane.f32.xlu0 %v409
        %v411 = vpop.xlane.xlu0 %410
        %v412 = vrot.slane %v411, 4
        %v413 = vadd.f32 %v411, %v412
        %v414 = vrot.slane %v413, 2
        %v415 = vadd.f32 %v413, %v414
        %v416 = vrot.slane %v415, 1
        %v417 = vadd.f32 %v415, %v416
        %s418 = vtos %v417
        %v419 = vstv %s418
        %v420 = vadd.f32 %v419, 0.0
        %vm421 = vcmask 0
        %422 = vst.msk [vmem:[%s365] sm:$0x1] %vm421, %v420
        %v423 = vld [vmem:[%s309] sm:$0xff]
        %v424 = vld [vmem:[%s309 + $0x8] sm:$0xff]
        %v425 = vld [vmem:[%s309 + $0x10] sm:$0xff]
        %v426 = vld [vmem:[%s309 + $0x18] sm:$0xff]
        %v427 = vmax.f32 %v423, %v424
        %v428 = vmax.f32 %v427, %v425
        %v429 = vmax.f32 %v428, %v426
        %v430 = vsub.f32 %v423, %v429
        %v431 = vmul.f32 %v430, 1.442695
        %v432 = vpow.pop %v431
        %v433 = vadd.f32 %v432, 0.0
        %vm434 = vcmp.eq.s32.totalorder %v366, 0
        %v435 = vsel %vm434, %v423, 0.0
        %v436 = vadd.f32 %v435, 0.0
        %v437 = vsub.f32 %v424, %v429
        %v438 = vmul.f32 %v437, 1.442695
        %v439 = vpow.pop %v438
        %v440 = vadd.f32 %v433, %v439
        %vm441 = vcmp.eq.s32.totalorder %v366, 1
        %v442 = vsel %vm441, %v424, 0.0
        %v443 = vadd.f32 %v436, %v442
        %v444 = vsub.f32 %v425, %v429
        %v445 = vmul.f32 %v444, 1.442695
        %v446 = vpow.pop %v445
        %v447 = vadd.f32 %v440, %v446
        %vm448 = vcmp.eq.s32.totalorder %v366, 2
        %v449 = vsel %vm448, %v425, 0.0
        %v450 = vadd.f32 %v443, %v449
        %v451 = vsub.f32 %v426, %v429
        %v452 = vmul.f32 %v451, 1.442695
        %v453 = vpow.pop %v452
        %v454 = vadd.f32 %v447, %v453
        %vm455 = vcmp.eq.s32.totalorder %v366, 3
        %v456 = vsel %vm455, %v426, 0.0
        %v457 = vadd.f32 %v450, %v456
        %v458 = vlog2.pop %v454
        %v459 = vmul.f32 %v458, 0.6931472
        %v460 = vadd.f32 %v459, %v429
        %v461 = vsub.f32 %v460, %v457
        %462 = vst [vmem:[%s357] sm:$0xff] %v461
        %s463 = sand.u32 %s141, 1
        %s464 = scalar_lea.sflag [#allocation4], %s463
        %s465 = sand.u32 %s141, 1
        %s466 = smul.addr %s465, 8
        %s467 = scalar_lea.vmem [#allocation10], %s466
        %p468 = scmp.lt.s32.totalorder %s29, 1
        %s469 = scalar_select %p468, %s29, 1
        %s470 = scalar_lea.vmem %s5, %s469
        // Predicated region
        $region53: #{tpu_custom_call.1} parent=35 // pred_check
          %p471 = pneg %p151
        $region54: #{tpu_custom_call.1} parent=35 // pred_check_branch
          %473 = sbr.rel (%p471) target = $region56
        $region55: #{tpu_custom_call.1} parent=35 // pred_region
          %s475 = ssub.s32 128, 128
          %476 = vsyncadd %s464, %s475
          %s477 = smul.addr %s29, 128
          %s478 = scalar_lea.hbm %s4, %s477
          %s480 = sshll.u32 %s467, 4
          %s481 = int_to_ptr.vmem [resolvable:$true] %s480
          %483 = dma.vmem_to_hbm [thread:$0]  %s481, 128, %s478, %s464
        $region56: #{tpu_custom_call.1} parent=35 // pred_fallthru
          _
        // Predicated region
        $region57: #{tpu_custom_call.1} parent=35 // pred_check
          %p484 = pneg %p177
        $region58: #{tpu_custom_call.1} parent=35 // pred_check_branch
          %486 = sbr.rel (%p484) target = $region60
        $region59: #{tpu_custom_call.1} parent=35 // pred_region
          _
        $region60: #{tpu_custom_call.1} parent=35 // pred_fallthru
          _
      $region36: #{tpu_custom_call.1} parent=5 // pred_fallthru
        _
      %p487 = scmp.le.s32.totalorder 2, %s24
      // Predicated region
      $region61: #{tpu_custom_call.1} parent=5 // pred_check
        %p488 = pneg %p487
      $region62: #{tpu_custom_call.1} parent=5 // pred_check_branch
        %490 = sbr.rel (%p488) target = $region64
      $region63: #{tpu_custom_call.1} parent=5 // pred_region
        %s491 = ssub.s32 %s24, 2
        // Predicated region
        $region65: #{tpu_custom_call.1} parent=63 // pred_check
          %p492 = pneg %p157
        $region66: #{tpu_custom_call.1} parent=63 // pred_check_branch
          %494 = sbr.rel (%p492) target = $region68
        $region67: #{tpu_custom_call.1} parent=63 // pred_region
          %s495 = sand.u32 %s142, 1
          %s496 = scalar_lea.sflag [#allocation4], %s495
          %s497 = sand.u32 %s142, 1
          %s498 = smul.addr %s497, 8
          %s499 = scalar_lea.vmem [#allocation10], %s498
          %500 = dma.done %s496, 128
        $region68: #{tpu_custom_call.1} parent=63 // pred_fallthru
          _
        // Predicated region
        $region69: #{tpu_custom_call.1} parent=63 // pred_check
          %p501 = pneg %p183
        $region70: #{tpu_custom_call.1} parent=63 // pred_check_branch
          %503 = sbr.rel (%p501) target = $region72
        $region71: #{tpu_custom_call.1} parent=63 // pred_region
          %p504 = scmp.lt.s32.totalorder %s30, 1
          %s505 = scalar_select %p504, %s30, 1
          %s506 = scalar_lea.vmem %s5, %s505
        $region72: #{tpu_custom_call.1} parent=63 // pred_fallthru
          _
      $region64: #{tpu_custom_call.1} parent=5 // pred_fallthru
        _
    $region6: #{tpu_custom_call.1} parent=1 // loop_footer
      %s28 = sadd.s32 1, %s24
    $region7: #{tpu_custom_call.1} parent=1 // loop_footer_branch
      %23 = sbr.rel target = $region3
    $region8: #{tpu_custom_call.1} parent=1 // loop_exit
      _
    %507 = vsyncpa [#allocation3], 1
    %s508 = scalar_lea.sflag [#allocation3], 1
    %509 = vsyncpa %s508, 1
    %510 = vsyncpa [#allocation6], 1
    %s511 = scalar_lea.sflag [#allocation6], 1
    %512 = vsyncpa %s511, 1
    %513 = vsyncpa [#allocation9], 1
    %s514 = scalar_lea.sflag [#allocation9], 1
    %515 = vsyncpa %s514, 1
    %516 = vsyncpa [#allocation4], 1
    %s517 = scalar_lea.sflag [#allocation4], 1
    %518 = vsyncpa %s517, 1

</llo_original>
